<compile_context>
chip_gen: v7x
topology: tpu7x:2x2x1
jax: 0.10.0
libtpu: 0.0.40
codegen_flags: <defaults>
</compile_context>

<pallas_src>
import functools

import jax
import jax.numpy as jnp
from jax.experimental import pallas as pl
from jax.experimental.pallas import tpu as pltpu


# ----------------------------------------------------------------------------
# Kernel
# ----------------------------------------------------------------------------
def _ffn_kernel(x_ref, w1_ref, b1_ref, w2_ref, b2_ref, o_ref, acc_ref):
    # x_ref:  (tm, d_model)        -- resident across the k (d_ff) axis
    # w1_ref: (tff, d_model)       -- contiguous streamed d_ff-row slab of W1
    # b1_ref: (1, tff)   (f32)     -- streamed d_ff slab of b1
    # w2_ref: (tff, d_model)       -- contiguous streamed d_ff-row slab of W2
    # b2_ref: (1, d_model) (f32)   -- constant
    # o_ref:  (tm, d_model)        -- written once at the last k step
    # acc_ref:(tm, d_model) f32 VMEM scratch accumulator
    k = pl.program_id(1)

    @pl.when(k == 0)
    def _init():
        acc_ref[...] = jnp.zeros_like(acc_ref)

    # linear1 slab: contract on d_model (RHS-transposed matmul on the MXU):
    # (tm, d_model) x (tff, d_model) -> (tm, tff), f32 accumulate.
    h = jax.lax.dot_general(
        x_ref[...],
        w1_ref[...],
        dimension_numbers=(((1,), (1,)), ((), ())),
        preferred_element_type=jnp.float32,
    )
    h = jnp.maximum(h + b1_ref[...], 0.0)  # bias + ReLU in f32
    # dropout (eval mode) == identity

    # linear2 slab accumulates the partial d_ff contraction in f32.
    acc_ref[...] += jnp.dot(
        h.astype(w2_ref.dtype), w2_ref[...], preferred_element_type=jnp.float32
    )

    @pl.when(k == pl.num_programs(1) - 1)
    def _finalize():
        o_ref[...] = (acc_ref[...] + b2_ref[...]).astype(o_ref.dtype)


# ----------------------------------------------------------------------------
# Tiling / hardware introspection
# ----------------------------------------------------------------------------
def _round_up(v, m):
    return -(-v // m) * m


def _tpu_vmem_and_kind():
    """(physical VMEM bytes, lowered device_kind string)."""
    try:
        kind = jax.devices()[0].device_kind.lower()
    except Exception:  # pragma: no cover
        kind = ""
    cap = None
    try:
        cap = int(getattr(pltpu.get_tpu_info(), "vmem_capacity_bytes", 0)) or None
    except Exception:  # pragma: no cover
        cap = None
    if cap is None:
        # conservative fallback if introspection is unavailable
        cap = 64 * 1024 * 1024 if "v7" in kind else 128 * 1024 * 1024
    return cap, kind


def _select_tiles(n, d_model, d_ff_pad, compute_bytes, out_bytes,
                  block_rows, block_ff):
    """Pick (block_rows, block_ff, vmem_limit_bytes) for this chip generation."""
    capacity, kind = _tpu_vmem_and_kind()
    small_vmem = capacity <= 64 * 1024 * 1024          # v7x-class TensorCore
    is_v5 = "v5" in kind
    # Leave ~20% headroom for Mosaic internal scratch / materialized h tile.
    budget = (capacity * 13) // 16

    # Target rows per weight pass (arithmetic-intensity lever):
    #   v5e ~512, v6e ~1024, v7x ~1280 per TC (megacore duplicates weight DMA).
    if block_rows is not None:
        target_rows = block_rows
    elif small_vmem:
        target_rows = 1280
    elif is_v5:
        target_rows = 512
    else:
        target_rows = 1024

    # d_ff slab width: prefer 256 on v7x (spend VMEM on rows instead), 512
    # elsewhere.  d_ff_pad is always a multiple of 128.
    if block_ff is not None:
        assert d_ff_pad % block_ff == 0, "block_ff must divide padded d_ff"
        cands = [block_ff]
    else:
        prefs = (256, 128) if small_vmem else (512, 256, 128)
        cands = [c for c in prefs if d_ff_pad % c == 0]
        assert cands, "padded d_ff must be a multiple of 128"

    chosen_ff, chosen_rows = cands[-1], 16
    for tff in cands:
        # VMEM footprint model (double-buffered pipeline):
        fixed = 2 * (2 * d_model * tff * compute_bytes)       # W1+W2 slabs
        fixed += 2 * 4 * (tff + d_model)                      # biases (f32)
        per_row = (2 * d_model * compute_bytes                # x tile
                   + 4 * d_model                              # f32 accumulator
                   + 2 * d_model * out_bytes                  # output tile
                   + tff * (4 + compute_bytes))               # h + cast copy
        tm = int((budget - fixed) // per_row)
        tm = max(16, min(tm, target_rows))
        chosen_ff, chosen_rows = tff, tm
        if tm >= 256:
            break  # enough rows with this slab width; don't shrink further

    # Clamp to the problem size and round to hardware-friendly multiples.
    rows = min(chosen_rows, _round_up(n, 16))
    if rows >= 128:
        rows = (rows // 128) * 128
    else:
        rows = max(16, _round_up(rows, 16))

    # Keep >= 2 row tiles when there is enough work (software pipelining and
    # megacore row-sharding both need it).
    if n >= 512 and -(-n // rows) < 2:
        rows = max(128, _round_up(-(-n // 2), 128))

    return rows, chosen_ff, int(budget)


# ----------------------------------------------------------------------------
# Parameter preparation (one-time, outside the hot path)
# ----------------------------------------------------------------------------
def prepare_params(w1, b1, w2, b2, compute_dtype=jnp.bfloat16):
    """Convert PyTorch-layout FeedForward params to the kernel layout/dtype.

    Inputs (PyTorch nn.Linear layout):
      w1: (d_ff, d_model), b1: (d_ff,), w2: (d_model, d_ff), b2: (d_model,)
    Returns kernel-layout params with d_ff zero-padded to a multiple of 128,
    weights cast once to `compute_dtype` (bf16 by default -> full MXU rate and
    half the weight HBM traffic; pass jnp.float32 for a strict f32 path).
    """
    d_ff, d_model = w1.shape
    assert w2.shape == (d_model, d_ff)
    d_ff_pad = _round_up(d_ff, 128)
    pad = d_ff_pad - d_ff

    w1k = w1.astype(compute_dtype)                      # (d_ff, d_model)
    w2k = jnp.transpose(w2).astype(compute_dtype)       # (d_ff, d_model)
    b1k = b1.reshape(1, d_ff).astype(jnp.float32)
    if pad:
        w1k = jnp.pad(w1k, ((0, pad), (0, 0)))
        w2k = jnp.pad(w2k, ((0, pad), (0, 0)))
        b1k = jnp.pad(b1k, ((0, 0), (0, pad)))
    b2k = b2.reshape(1, d_model).astype(jnp.float32)
    return w1k, b1k, w2k, b2k


# ----------------------------------------------------------------------------
# Forward pass
# ----------------------------------------------------------------------------
@functools.partial(jax.jit, static_argnames=("block_rows", "block_ff"))
def feed_forward(x, w1k, b1k, w2k, b2k, *, block_rows=None, block_ff=None):
    """x: (batch, seq, d_model) -> (batch, seq, d_model).

    Params must come from `prepare_params` (kernel layout, weights already in
    the compute dtype -> no per-call weight cast / HBM copy).
    """
    batch, seq, d_model = x.shape
    d_ff_pad, dm_w = w1k.shape
    assert dm_w == d_model and w2k.shape == (d_ff_pad, d_model)
    assert b1k.shape == (1, d_ff_pad) and b2k.shape == (1, d_model)
    assert d_ff_pad % 128 == 0

    n = batch * seq
    out_dtype = x.dtype
    compute_dtype = w1k.dtype  # bf16 by default (from prepare_params)

    tm, tff, vmem_limit = _select_tiles(
        n, d_model, d_ff_pad,
        compute_bytes=jnp.dtype(compute_dtype).itemsize,
        out_bytes=jnp.dtype(out_dtype).itemsize,
        block_rows=block_rows, block_ff=block_ff,
    )
    n_pad = _round_up(n, tm)

    # Activations are small relative to weights; per-call cast/pad is cheap.
    x2d = x.reshape(n, d_model).astype(compute_dtype)
    if n_pad != n:
        x2d = jnp.pad(x2d, ((0, n_pad - n), (0, 0)))

    grid = (n_pad // tm, d_ff_pad // tff)

    out2d = pl.pallas_call(
        _ffn_kernel,
        out_shape=jax.ShapeDtypeStruct((n_pad, d_model), out_dtype),
        grid_spec=pltpu.PrefetchScalarGridSpec(
            num_scalar_prefetch=0,
            grid=grid,
            in_specs=[
                # x tile: fetched once per row tile (constant along k)
                pl.BlockSpec((tm, d_model), lambda i, k: (i, 0)),
                # W1 slab: contiguous d_ff rows streamed along k
                # (bump to pipeline_mode=pl.Buffered(3) only if xprof shows
                #  exposed DMA at row-tile boundaries)
                pl.BlockSpec((tff, d_model), lambda i, k: (k, 0)),
                pl.BlockSpec((1, tff), lambda i, k: (0, k)),
                # W2 slab: contiguous d_ff rows streamed along k
                pl.BlockSpec((tff, d_model), lambda i, k: (k, 0)),
                # b2: constant index; tiny
                pl.BlockSpec((1, d_model), lambda i, k: (0, 0)),
            ],
            # Lane-dense output (last dim = d_model), written only at k==last.
            out_specs=pl.BlockSpec((tm, d_model), lambda i, k: (i, 0)),
            scratch_shapes=[pltpu.VMEM((tm, d_model), jnp.float32)],
        ),
        compiler_params=pltpu.CompilerParams(
            # reduction axis last + "arbitrary"; row axis "parallel" so the
            # 2 TensorCores on v7x split row tiles.
            dimension_semantics=("parallel", "arbitrary"),
            # Budgeted (~80% of physical) scoped-VMEM limit, never the full
            # physical capacity -> headroom for Mosaic internal scratch.
            vmem_limit_bytes=vmem_limit,
        ),
    )(x2d, w1k, b1k, w2k, b2k)

    if n_pad != n:
        out2d = out2d[:n]
    return out2d.reshape(batch, seq, d_model)


# ----------------------------------------------------------------------------
# Init + reference (PyTorch nn.Linear semantics / layout)
# ----------------------------------------------------------------------------
def init_params(key, d_model, d_ff, dtype=jnp.float32):
    """nn.Linear-style uniform(-1/sqrt(fan_in), 1/sqrt(fan_in)), PyTorch layout."""
    k1, k2, k3, k4 = jax.random.split(key, 4)
    bound1 = 1.0 / (d_model ** 0.5)
    bound2 = 1.0 / (d_ff ** 0.5)
    w1 = jax.random.uniform(k1, (d_ff, d_model), dtype, -bound1, bound1)
    b1 = jax.random.uniform(k2, (d_ff,), dtype, -bound1, bound1)
    w2 = jax.random.uniform(k3, (d_model, d_ff), dtype, -bound2, bound2)
    b2 = jax.random.uniform(k4, (d_model,), dtype, -bound2, bound2)
    return w1, b1, w2, b2


def _ref_ffn(x, w1, b1, w2, b2):
    # eval-mode dropout == identity
    return jnp.maximum(x @ w1.T + b1, 0.0) @ w2.T + b2


if __name__ == "__main__":
    key = jax.random.PRNGKey(0)

    # --- test 1: small shapes from the module spec -------------------------
    batch, seq, d_model, d_ff = 2, 8, 32, 64
    kx, kp = jax.random.split(key)
    x = jax.random.normal(kx, (batch, seq, d_model), jnp.float32)
    w1, b1, w2, b2 = init_params(kp, d_model, d_ff)
    ref = _ref_ffn(x, w1, b1, w2, b2)

    # strict f32 path (opt-in)
    p32 = prepare_params(w1, b1, w2, b2, compute_dtype=jnp.float32)
    out = jax.block_until_ready(feed_forward(x, *p32))
    assert out.shape == (batch, seq, d_model)
    assert jnp.allclose(out, ref, atol=1e-5, rtol=1e-5)

    # default bf16 MXU path (production config)
    pbf = prepare_params(w1, b1, w2, b2)  # bf16 by default
    out_bf16 = jax.block_until_ready(feed_forward(x, *pbf))
    assert jnp.allclose(out_bf16.astype(jnp.float32), ref, atol=5e-2, rtol=5e-2)

    # --- test 2: multi-tile reduction + ragged rows (d_ff padding path) ----
    d_model2, d_ff2 = 128, 1024
    x2 = jax.random.normal(jax.random.PRNGKey(1), (4, 100, d_model2), jnp.float32)
    w1b, b1b, w2b, b2b = init_params(jax.random.PRNGKey(2), d_model2, d_ff2)
    ref2 = _ref_ffn(x2, w1b, b1b, w2b, b2b)

    p32b = prepare_params(w1b, b1b, w2b, b2b, compute_dtype=jnp.float32)
    out2 = jax.block_until_ready(feed_forward(x2, *p32b))
    assert jnp.allclose(out2, ref2, atol=1e-4, rtol=1e-4)

    pbfb = prepare_params(w1b, b1b, w2b, b2b)
    out2_bf16 = jax.block_until_ready(feed_forward(x2, *pbfb))
    assert jnp.allclose(out2_bf16.astype(jnp.float32), ref2, atol=5e-2, rtol=5e-2)

    print("KERNEL_OK")
</pallas_src>

<mosaic_0001>
module attributes {stable_mosaic.version = 11 : i64} {
  func.func @_ffn_kernel(%arg0: i32, %arg1: i32, %arg2: memref<16x32xf32, #tpu.memory_space<vmem>>, %arg3: memref<128x32xf32, #tpu.memory_space<vmem>>, %arg4: memref<1x128xf32, #tpu.memory_space<vmem>>, %arg5: memref<128x32xf32, #tpu.memory_space<vmem>>, %arg6: memref<1x32xf32, #tpu.memory_space<vmem>>, %arg7: memref<16x32xf32, #tpu.memory_space<vmem>>, %arg8: memref<16x32xf32, #tpu.memory_space<vmem>>) attributes {dimension_semantics = [#tpu.dimension_semantics<parallel>, #tpu.dimension_semantics<arbitrary>], iteration_bounds = array<i64: 1, 1>, scalar_prefetch = 0 : i64, scratch_operands = 1 : i64, tpu.core_type = #tpu.core_type<tc>, window_params = [{transform_indices = @transform_0, window_bounds = array<i64: 16, 32>}, {transform_indices = @transform_1, window_bounds = array<i64: 128, 32>}, {transform_indices = @transform_2, window_bounds = array<i64: 1, 128>}, {transform_indices = @transform_3, window_bounds = array<i64: 128, 32>}, {pipeline_mode = #tpu.pipeline_mode<synchronous>, transform_indices = @transform_4, window_bounds = array<i64: 1, 32>}, {transform_indices = @transform_5, window_bounds = array<i64: 16, 32>}]} {
    %c0_i32 = arith.constant 0 : i32
    %0 = arith.cmpi eq, %arg1, %c0_i32 : i32
    %1 = arith.extui %0 : i1 to i32
    %c0_i32_0 = arith.constant 0 : i32
    %2 = arith.cmpi ne, %1, %c0_i32_0 : i32
    scf.if %2 {
      %cst_16 = arith.constant 0.000000e+00 : f32
      %19 = vector.broadcast %cst_16 : f32 to vector<16x32xf32>
      %c0_17 = arith.constant 0 : index
      %c0_18 = arith.constant 0 : index
      %20 = vector.load %arg8[%c0_17, %c0_18] : memref<16x32xf32, #tpu.memory_space<vmem>>, vector<16x32xf32>
      tpu.vector_store %arg8[%c0_17, %c0_18], %19 {strides = array<i32>} : memref<16x32xf32, #tpu.memory_space<vmem>>, vector<16x32xf32>,
    } else {
    }
    %c0 = arith.constant 0 : index
    %c0_1 = arith.constant 0 : index
    %3 = vector.load %arg2[%c0, %c0_1] : memref<16x32xf32, #tpu.memory_space<vmem>>, vector<16x32xf32>
    %c0_2 = arith.constant 0 : index
    %c0_3 = arith.constant 0 : index
    %4 = vector.load %arg3[%c0_2, %c0_3] : memref<128x32xf32, #tpu.memory_space<vmem>>, vector<128x32xf32>
    %cst = arith.constant dense<0.000000e+00> : vector<16x128xf32>
    %5 = tpu.matmul %3, %4, %cst {dimension_numbers = #tpu.dot_dimension_numbers<[1], [1], [0], [0], [0, 0, 1, 0], [], []>} : vector<16x32xf32>, vector<128x32xf32>, vector<16x128xf32> -> vector<16x128xf32>
    %c0_4 = arith.constant 0 : index
    %c0_5 = arith.constant 0 : index
    %6 = vector.load %arg4[%c0_4, %c0_5] : memref<1x128xf32, #tpu.memory_space<vmem>>, vector<1x128xf32>
    %7 = vector.broadcast %6 : vector<1x128xf32> to vector<16x128xf32>
    %8 = arith.addf %5, %7 : vector<16x128xf32>
    %cst_6 = arith.constant 0.000000e+00 : f32
    %9 = vector.broadcast %cst_6 : f32 to vector<16x128xf32>
    %10 = arith.maximumf %8, %9 : vector<16x128xf32>
    %c0_7 = arith.constant 0 : index
    %c0_8 = arith.constant 0 : index
    %11 = vector.load %arg8[%c0_7, %c0_8] : memref<16x32xf32, #tpu.memory_space<vmem>>, vector<16x32xf32>
    %c0_9 = arith.constant 0 : index
    %c0_10 = arith.constant 0 : index
    %12 = vector.load %arg5[%c0_9, %c0_10] : memref<128x32xf32, #tpu.memory_space<vmem>>, vector<128x32xf32>
    %cst_11 = arith.constant dense<0.000000e+00> : vector<16x32xf32>
    %13 = tpu.matmul %10, %12, %cst_11 {dimension_numbers = #tpu.dot_dimension_numbers<[1], [0], [0], [1], [0, 0, 1, 1], [], []>} : vector<16x128xf32>, vector<128x32xf32>, vector<16x32xf32> -> vector<16x32xf32>
    %14 = arith.addf %11, %13 : vector<16x32xf32>
    %c0_12 = arith.constant 0 : index
    %c0_13 = arith.constant 0 : index
    %15 = vector.load %arg8[%c0_12, %c0_13] : memref<16x32xf32, #tpu.memory_space<vmem>>, vector<16x32xf32>
    tpu.vector_store %arg8[%c0_12, %c0_13], %14 {strides = array<i32>} : memref<16x32xf32, #tpu.memory_space<vmem>>, vector<16x32xf32>,
    %c0_i32_14 = arith.constant 0 : i32
    %16 = arith.cmpi eq, %arg1, %c0_i32_14 : i32
    %17 = arith.extui %16 : i1 to i32
    %c0_i32_15 = arith.constant 0 : i32
    %18 = arith.cmpi ne, %17, %c0_i32_15 : i32
    scf.if %18 {
      %c0_16 = arith.constant 0 : index
      %c0_17 = arith.constant 0 : index
      %19 = vector.load %arg8[%c0_16, %c0_17] : memref<16x32xf32, #tpu.memory_space<vmem>>, vector<16x32xf32>
      %c0_18 = arith.constant 0 : index
      %c0_19 = arith.constant 0 : index
      %20 = vector.load %arg6[%c0_18, %c0_19] : memref<1x32xf32, #tpu.memory_space<vmem>>, vector<1x32xf32>
      %21 = vector.broadcast %20 : vector<1x32xf32> to vector<16x32xf32>
      %22 = arith.addf %19, %21 : vector<16x32xf32>
      %c0_20 = arith.constant 0 : index
      %c0_21 = arith.constant 0 : index
      %23 = vector.load %arg7[%c0_20, %c0_21] : memref<16x32xf32, #tpu.memory_space<vmem>>, vector<16x32xf32>
      tpu.vector_store %arg7[%c0_20, %c0_21], %22 {strides = array<i32>} : memref<16x32xf32, #tpu.memory_space<vmem>>, vector<16x32xf32>,
    } else {
    }
    return
  }
  func.func @transform_0(%arg0: i32, %arg1: i32) -> (i32, i32) {
    %c0_i32 = arith.constant 0 : i32
    %c0_i32_0 = arith.constant 0 : i32
    return %arg0, %c0_i32 : i32, i32
  }
  func.func @transform_1(%arg0: i32, %arg1: i32) -> (i32, i32) {
    %c0_i32 = arith.constant 0 : i32
    %c0_i32_0 = arith.constant 0 : i32
    return %arg1, %c0_i32 : i32, i32
  }
  func.func @transform_2(%arg0: i32, %arg1: i32) -> (i32, i32) {
    %c0_i32 = arith.constant 0 : i32
    %c0_i32_0 = arith.constant 0 : i32
    return %c0_i32, %arg1 : i32, i32
  }
  func.func @transform_3(%arg0: i32, %arg1: i32) -> (i32, i32) {
    %c0_i32 = arith.constant 0 : i32
    %c0_i32_0 = arith.constant 0 : i32
    return %arg1, %c0_i32 : i32, i32
  }
  func.func @transform_4(%arg0: i32, %arg1: i32) -> (i32, i32) {
    %c0_i32 = arith.constant 0 : i32
    %c0_i32_0 = arith.constant 0 : i32
    %c0_i32_1 = arith.constant 0 : i32
    return %c0_i32, %c0_i32_0 : i32, i32
  }
  func.func @transform_5(%arg0: i32, %arg1: i32) -> (i32, i32) {
    %c0_i32 = arith.constant 0 : i32
    %c0_i32_0 = arith.constant 0 : i32
    return %arg0, %c0_i32 : i32, i32
  }
}

</mosaic_0001>

<llo_original>
// kernel: feed_forward.1
$region0: #{feed_forward.1}
  #allocation0 [shape = 'u32[]', space=smem, size = 0x4, offset = 0x4, fixed_abs, tag = 'smem constant byte address 0x4 - core index']
  #allocation1 [shape = 'u32[144,128]{1,0:T(1,128)}', space=vmem, size = 0x12000, scoped, tag = 'internal scratch']
  #allocation2 [shape = 'f32[16,32]{1,0:T(8,128)}', space=vmem, size = 0x2000, scoped, tag = 'scratch operand']
  %s0 = inlined_call_operand.hbm [shape: f32[16,32], index: 0, kind: input, shape index: {}]
  %s1 = inlined_call_operand.hbm [shape: f32[128,32], index: 1, kind: input, shape index: {}]
  %s2 = inlined_call_operand.hbm [shape: f32[1,128], index: 2, kind: input, shape index: {}]
  %s3 = inlined_call_operand.hbm [shape: f32[128,32], index: 3, kind: input, shape index: {}]
  %s4 = inlined_call_operand.hbm [shape: f32[1,32], index: 4, kind: input, shape index: {}]
  %s5 = inlined_call_operand.hbm [shape: f32[16,32], index: 5, kind: output, shape index: {}]
  %s6 = sld [smem:[#allocation0]]
  $region58: #{feed_forward.1} parent=0
    _
  %s8 = ssub.s32 1, %s6
  %s9 = scalar_select 0, %s8, %s6
  $region1: #{feed_forward.1} parent=0
    #allocation3 [shape = 'u8[8192]{0}', space=vmem, size = 0x2000, scoped, tag = 'input window, operand 0, single buffered']
    #allocation4 [shape = 's32[1]{0}', space=sflag, size = 0x4, scoped, tag = 'scoped memory for feed_forward.1']
    #allocation5 [shape = 's32[1]{0}', space=sflag, size = 0x4, scoped, tag = 'scoped memory for feed_forward.1']
    #allocation6 [shape = 'u8[65536]{0}', space=vmem, size = 0x10000, scoped, tag = 'input window, operand 1, single buffered']
    #allocation7 [shape = 's32[1]{0}', space=sflag, size = 0x4, scoped, tag = 'scoped memory for feed_forward.1']
    #allocation8 [shape = 'u8[512]{0}', space=vmem, size = 0x400, scoped, tag = 'input window, operand 2, single buffered']
    #allocation9 [shape = 'u8[65536]{0}', space=vmem, size = 0x10000, scoped, tag = 'input window, operand 3, single buffered']
    #allocation10 [shape = 's32[1]{0}', space=sflag, size = 0x4, scoped, tag = 'scoped memory for feed_forward.1']
    #allocation11 [shape = 'u8[512]{0}', space=vmem, size = 0x400, scoped, tag = 'input window, operand 4, single buffered']
    #allocation12 [shape = 'u8[8192]{0}', space=vmem, size = 0x2000, scoped, tag = 'output window, operand 0, single buffered']
    %10 = vsyncpa [#allocation4], 0
    %11 = vsyncpa [#allocation7], 0
    %12 = vsyncpa [#allocation10], 0
    %13 = vsyncpa [#allocation5], 0
    // Predicated region
    $region2: #{feed_forward.1} parent=1 // pred_check
      _
    $region3: #{feed_forward.1} parent=1 // pred_check_branch
      %15 = sbr.rel (0) target = $region5
    $region4: #{feed_forward.1} parent=1 // pred_region
      %s17 = ssub.s32 256, 256
      %18 = vsyncadd [#allocation4], %s17
      %s19 = sshll.u32 [#allocation3], 4
      %s20 = int_to_ptr.vmem [resolvable:$true] %s19
      %25 = dma.hbm_to_vmem [thread:$0]  %s0, 256, %s20, [#allocation4], 128, 128, 8
    $region5: #{feed_forward.1} parent=1 // pred_fallthru
      _
    // Predicated region
    $region6: #{feed_forward.1} parent=1 // pred_check
      _
    $region7: #{feed_forward.1} parent=1 // pred_check_branch
      %27 = sbr.rel (0) target = $region9
    $region8: #{feed_forward.1} parent=1 // pred_region
      %s29 = ssub.s32 2048, 2048
      %30 = vsyncadd [#allocation7], %s29
      %s31 = sshll.u32 [#allocation6], 4
      %s32 = int_to_ptr.vmem [resolvable:$true] %s31
      %37 = dma.hbm_to_vmem [thread:$0]  %s1, 2048, %s32, [#allocation7], 128, 128, 8
    $region9: #{feed_forward.1} parent=1 // pred_fallthru
      _
    // Predicated region
    $region10: #{feed_forward.1} parent=1 // pred_check
      _
    $region11: #{feed_forward.1} parent=1 // pred_check_branch
      %39 = sbr.rel (0) target = $region13
    $region12: #{feed_forward.1} parent=1 // pred_region
      %s41 = ssub.s32 16, 16
      %42 = vsyncadd [#allocation7], %s41
      %s44 = sshll.u32 [#allocation8], 4
      %s45 = int_to_ptr.vmem [resolvable:$true] %s44
      %47 = dma.hbm_to_vmem [thread:$0]  %s2, 16, %s45, [#allocation7]
    $region13: #{feed_forward.1} parent=1 // pred_fallthru
      _
    // Predicated region
    $region14: #{feed_forward.1} parent=1 // pred_check
      _
    $region15: #{feed_forward.1} parent=1 // pred_check_branch
      %49 = sbr.rel (0) target = $region17
    $region16: #{feed_forward.1} parent=1 // pred_region
      %s51 = ssub.s32 2048, 2048
      %52 = vsyncadd [#allocation10], %s51
      %s53 = sshll.u32 [#allocation9], 4
      %s54 = int_to_ptr.vmem [resolvable:$true] %s53
      %59 = dma.hbm_to_vmem [thread:$0]  %s3, 2048, %s54, [#allocation10], 128, 128, 8
    $region17: #{feed_forward.1} parent=1 // pred_fallthru
      _
    // Predicated region
    $region18: #{feed_forward.1} parent=1 // pred_check
      _
    $region19: #{feed_forward.1} parent=1 // pred_check_branch
      %61 = sbr.rel (0) target = $region21
    $region20: #{feed_forward.1} parent=1 // pred_region
      %s63 = ssub.s32 16, 16
      %64 = vsyncadd [#allocation10], %s63
      %s66 = sshll.u32 [#allocation11], 4
      %s67 = int_to_ptr.vmem [resolvable:$true] %s66
      %69 = dma.hbm_to_vmem [thread:$0]  %s4, 16, %s67, [#allocation10]
    $region21: #{feed_forward.1} parent=1 // pred_fallthru
      _
    // Predicated region
    $region22: #{feed_forward.1} parent=1 // pred_check
      _
    $region23: #{feed_forward.1} parent=1 // pred_check_branch
      %71 = sbr.rel (0) target = $region25
    $region24: #{feed_forward.1} parent=1 // pred_region
      %72 = dma.done [#allocation4], 256
    $region25: #{feed_forward.1} parent=1 // pred_fallthru
      _
    // Predicated region
    $region26: #{feed_forward.1} parent=1 // pred_check
      _
    $region27: #{feed_forward.1} parent=1 // pred_check_branch
      %74 = sbr.rel (0) target = $region29
    $region28: #{feed_forward.1} parent=1 // pred_region
      %75 = dma.done [#allocation7], 2048
    $region29: #{feed_forward.1} parent=1 // pred_fallthru
      _
    // Predicated region
    $region30: #{feed_forward.1} parent=1 // pred_check
      _
    $region31: #{feed_forward.1} parent=1 // pred_check_branch
      %77 = sbr.rel (0) target = $region33
    $region32: #{feed_forward.1} parent=1 // pred_region
      %78 = dma.done [#allocation7], 16
    $region33: #{feed_forward.1} parent=1 // pred_fallthru
      _
    // Predicated region
    $region34: #{feed_forward.1} parent=1 // pred_check
      _
    $region35: #{feed_forward.1} parent=1 // pred_check_branch
      %80 = sbr.rel (0) target = $region37
    $region36: #{feed_forward.1} parent=1 // pred_region
      %81 = dma.done [#allocation10], 2048
    $region37: #{feed_forward.1} parent=1 // pred_fallthru
      _
    // Predicated region
    $region38: #{feed_forward.1} parent=1 // pred_check
      _
    $region39: #{feed_forward.1} parent=1 // pred_check_branch
      %83 = sbr.rel (0) target = $region41
    $region40: #{feed_forward.1} parent=1 // pred_region
      %84 = dma.done [#allocation10], 16
    $region41: #{feed_forward.1} parent=1 // pred_fallthru
      _
    %p85 = scmp.eq.s32.totalorder 0, 0
    // Predicated region
    $region42: #{feed_forward.1} parent=1 // pred_check
      %p86 = pneg %p85
    $region43: #{feed_forward.1} parent=1 // pred_check_branch
      %88 = sbr.rel (%p86) target = $region45
    $region44: #{feed_forward.1} parent=1 // pred_region
      %vm89 = vcmask 261120
      %90 = vst.msk [vmem:[#allocation2] sm:$0xff] %vm89, 0.0
      %91 = vst.msk [vmem:[#allocation2 + $0x8] sm:$0xff] %vm89, 0.0
    $region45: #{feed_forward.1} parent=1 // pred_fallthru
      _
    %v92 = vld [vmem:[#allocation3] sm:$0xff]
    %v93 = vld [vmem:[#allocation3 + $0x8] sm:$0xff]
    %v94 = vld [vmem:[#allocation6] sm:$0xff]
    %v95 = vld [vmem:[#allocation6 + $0x8] sm:$0xff]
    %v96 = vld [vmem:[#allocation6 + $0x10] sm:$0xff]
    %v97 = vld [vmem:[#allocation6 + $0x18] sm:$0xff]
    %v98 = vld [vmem:[#allocation6 + $0x20] sm:$0xff]
    %v99 = vld [vmem:[#allocation6 + $0x28] sm:$0xff]
    %v100 = vld [vmem:[#allocation6 + $0x30] sm:$0xff]
    %v101 = vld [vmem:[#allocation6 + $0x38] sm:$0xff]
    %v102 = vld [vmem:[#allocation6 + $0x40] sm:$0xff]
    %v103 = vld [vmem:[#allocation6 + $0x48] sm:$0xff]
    %v104 = vld [vmem:[#allocation6 + $0x50] sm:$0xff]
    %v105 = vld [vmem:[#allocation6 + $0x58] sm:$0xff]
    %v106 = vld [vmem:[#allocation6 + $0x60] sm:$0xff]
    %v107 = vld [vmem:[#allocation6 + $0x68] sm:$0xff]
    %v108 = vld [vmem:[#allocation6 + $0x70] sm:$0xff]
    %v109 = vld [vmem:[#allocation6 + $0x78] sm:$0xff]
    %v110 = vld [vmem:[#allocation8] sm:$0x1]
    %v112 = vlaneseq
    %v113 = vshrl.u32 %v112, 7
    %v114 = vsub.s32 0, %v113
    %v115 = vrot.slane %v110, %v114
    %vm117 = vcmask 261120
    %v119 = vsel %vm117, %v92, 0
    %v122 = vsel %vm117, %v93, 0
    %v125 = vsel %vm117, %v94, 0
    %v128 = vsel %vm117, %v95, 0
    %v131 = vsel %vm117, %v96, 0
    %v134 = vsel %vm117, %v97, 0
    %v137 = vsel %vm117, %v98, 0
    %v140 = vsel %vm117, %v99, 0
    %v143 = vsel %vm117, %v100, 0
    %v146 = vsel %vm117, %v101, 0
    %v149 = vsel %vm117, %v102, 0
    %v152 = vsel %vm117, %v103, 0
    %v155 = vsel %vm117, %v104, 0
    %v158 = vsel %vm117, %v105, 0
    %v161 = vsel %vm117, %v106, 0
    %v164 = vsel %vm117, %v107, 0
    %v167 = vsel %vm117, %v108, 0
    %v170 = vsel %vm117, %v109, 0
    %172 = vmatprep.subr.mxu0 0.0
    %173 = vmatpush1.xpose.msra.mxu0 %v125
    %174 = vmatprep.subr.mxu0 0.0
    %175 = vmatpush1.xpose.msra.mxu0 %v128
    %176 = vmatprep.subr.mxu0 0.0
    %177 = vmatpush1.xpose.msra.mxu0 %v131
    %178 = vmatprep.subr.mxu0 0.0
    %179 = vmatpush1.xpose.msra.mxu0 %v134
    %180 = vmatprep.subr.mxu0 0.0
    %181 = vmatpush1.xpose.msra.mxu0 %v137
    %182 = vmatprep.subr.mxu0 0.0
    %183 = vmatpush1.xpose.msra.mxu0 %v140
    %184 = vmatprep.subr.mxu0 0.0
    %185 = vmatpush1.xpose.msra.mxu0 %v143
    %186 = vmatprep.subr.mxu0 0.0
    %187 = vmatpush1.xpose.msra.mxu0 %v146
    %188 = vmatprep.subr.mxu0 0.0
    %189 = vmatpush1.xpose.msra.mxu0 %v149
    %190 = vmatprep.subr.mxu0 0.0
    %191 = vmatpush1.xpose.msra.mxu0 %v152
    %192 = vmatprep.subr.mxu0 0.0
    %193 = vmatpush1.xpose.msra.mxu0 %v155
    %194 = vmatprep.subr.mxu0 0.0
    %195 = vmatpush1.xpose.msra.mxu0 %v158
    %196 = vmatprep.subr.mxu0 0.0
    %197 = vmatpush1.xpose.msra.mxu0 %v161
    %198 = vmatprep.subr.mxu0 0.0
    %199 = vmatpush1.xpose.msra.mxu0 %v164
    %200 = vmatprep.subr.mxu0 0.0
    %201 = vmatpush1.xpose.msra.mxu0 %v167
    %202 = vmatprep.subr.mxu0 0.0
    %203 = vmatpush1.xpose.msra.mxu0 %v170
    %204 = vmatprep.subr.mxu0 0.0
    %205 = vmatpush1.xpose.msra.mxu0 0.0
    %206 = vmatprep.subr.mxu0 0.0
    %207 = vmatpush1.xpose.msra.mxu0 0.0
    %208 = vmatprep.subr.mxu0 0.0
    %209 = vmatpush1.xpose.msra.mxu0 0.0
    %210 = vmatprep.subr.mxu0 0.0
    %211 = vmatpush1.xpose.msra.mxu0 0.0
    %212 = vmatprep.subr.mxu0 0.0
    %213 = vmatpush1.xpose.msra.mxu0 0.0
    %214 = vmatprep.subr.mxu0 0.0
    %215 = vmatpush1.xpose.msra.mxu0 0.0
    %216 = vmatprep.subr.mxu0 0.0
    %217 = vmatpush1.xpose.msra.mxu0 0.0
    %218 = vmatprep.subr.mxu0 0.0
    %219 = vmatpush1.xpose.msra.mxu0 0.0
    %220 = vmatprep.subr.mxu0 0.0
    %221 = vmatpush1.xpose.msra.mxu0 0.0
    %222 = vmatprep.subr.mxu0 0.0
    %223 = vmatpush1.xpose.msra.mxu0 0.0
    %224 = vmatprep.subr.mxu0 0.0
    %225 = vmatpush1.xpose.msra.mxu0 0.0
    %226 = vmatprep.subr.mxu0 0.0
    %227 = vmatpush1.xpose.msra.mxu0 0.0
    %228 = vmatprep.subr.mxu0 0.0
    %229 = vmatpush1.xpose.msra.mxu0 0.0
    %230 = vmatprep.subr.mxu0 0.0
    %231 = vmatpush1.xpose.msra.mxu0 0.0
    %232 = vmatprep.subr.mxu0 0.0
    %233 = vmatpush1.xpose.msra.mxu0 0.0
    %234 = vmatprep.subr.mxu0 0.0
    %235 = vmatpush1.xpose.msra.mxu0 0.0
    %236 = vmatprep.mubr.f32.mxu0 0.0
    %237 = vmatmul.mubr.f32.gmra.mrb[0].mxu0 %v119
    %v238 = vpop.f32.mrb[0].mxu0
    %v239 = vadd.f32 %v115, %v238
    %v240 = vpop.f32.mrb[0].mxu0
    %241 = vmatprep.mubr.f32.mxu0 0.0
    %242 = vmatmul.mubr.f32.gmra.mrb[0].mxu0 %v122
    %v243 = vpop.f32.mrb[0].mxu0
    %v244 = vadd.f32 %v115, %v243
    %v245 = vpop.f32.mrb[0].mxu0
    %246 = vdwg.mxu0
    %v247 = vmax.f32 %v239, 0.0
    %v248 = vmax.f32 %v244, 0.0
    %v249 = vld [vmem:[#allocation2] sm:$0xff]
    %v250 = vld [vmem:[#allocation2 + $0x8] sm:$0xff]
    %v251 = vld [vmem:[#allocation9] sm:$0xff]
    %v252 = vld [vmem:[#allocation9 + $0x8] sm:$0xff]
    %v253 = vld [vmem:[#allocation9 + $0x10] sm:$0xff]
    %v254 = vld [vmem:[#allocation9 + $0x18] sm:$0xff]
    %v255 = vld [vmem:[#allocation9 + $0x20] sm:$0xff]
    %v256 = vld [vmem:[#allocation9 + $0x28] sm:$0xff]
    %v257 = vld [vmem:[#allocation9 + $0x30] sm:$0xff]
    %v258 = vld [vmem:[#allocation9 + $0x38] sm:$0xff]
    %v259 = vld [vmem:[#allocation9 + $0x40] sm:$0xff]
    %v260 = vld [vmem:[#allocation9 + $0x48] sm:$0xff]
    %v261 = vld [vmem:[#allocation9 + $0x50] sm:$0xff]
    %v262 = vld [vmem:[#allocation9 + $0x58] sm:$0xff]
    %v263 = vld [vmem:[#allocation9 + $0x60] sm:$0xff]
    %v264 = vld [vmem:[#allocation9 + $0x68] sm:$0xff]
    %v265 = vld [vmem:[#allocation9 + $0x70] sm:$0xff]
    %v266 = vld [vmem:[#allocation9 + $0x78] sm:$0xff]
    %267 = vmatprep.subr.mxu0 0.0
    %268 = vmatpush1.msra.mxu0 %v251
    %269 = vmatprep.subr.mxu0 0.0
    %270 = vmatpush1.msra.mxu0 %v252
    %271 = vmatprep.subr.mxu0 0.0
    %272 = vmatpush1.msra.mxu0 %v253
    %273 = vmatprep.subr.mxu0 0.0
    %274 = vmatpush1.msra.mxu0 %v254
    %275 = vmatprep.subr.mxu0 0.0
    %276 = vmatpush1.msra.mxu0 %v255
    %277 = vmatprep.subr.mxu0 0.0
    %278 = vmatpush1.msra.mxu0 %v256
    %279 = vmatprep.subr.mxu0 0.0
    %280 = vmatpush1.msra.mxu0 %v257
    %281 = vmatprep.subr.mxu0 0.0
    %282 = vmatpush1.msra.mxu0 %v258
    %283 = vmatprep.subr.mxu0 0.0
    %284 = vmatpush1.msra.mxu0 %v259
    %285 = vmatprep.subr.mxu0 0.0
    %286 = vmatpush1.msra.mxu0 %v260
    %287 = vmatprep.subr.mxu0 0.0
    %288 = vmatpush1.msra.mxu0 %v261
    %289 = vmatprep.subr.mxu0 0.0
    %290 = vmatpush1.msra.mxu0 %v262
    %291 = vmatprep.subr.mxu0 0.0
    %292 = vmatpush1.msra.mxu0 %v263
    %293 = vmatprep.subr.mxu0 0.0
    %294 = vmatpush1.msra.mxu0 %v264
    %295 = vmatprep.subr.mxu0 0.0
    %296 = vmatpush1.msra.mxu0 %v265
    %297 = vmatprep.subr.mxu0 0.0
    %298 = vmatpush1.msra.mxu0 %v266
    %299 = vmatprep.subr.mxu0 0.0
    %300 = vmatpush1.msra.mxu0 0.0
    %301 = vmatprep.subr.mxu0 0.0
    %302 = vmatpush1.msra.mxu0 0.0
    %303 = vmatprep.subr.mxu0 0.0
    %304 = vmatpush1.msra.mxu0 0.0
    %305 = vmatprep.subr.mxu0 0.0
    %306 = vmatpush1.msra.mxu0 0.0
    %307 = vmatprep.subr.mxu0 0.0
    %308 = vmatpush1.msra.mxu0 0.0
    %309 = vmatprep.subr.mxu0 0.0
    %310 = vmatpush1.msra.mxu0 0.0
    %311 = vmatprep.subr.mxu0 0.0
    %312 = vmatpush1.msra.mxu0 0.0
    %313 = vmatprep.subr.mxu0 0.0
    %314 = vmatpush1.msra.mxu0 0.0
    %315 = vmatprep.subr.mxu0 0.0
    %316 = vmatpush1.msra.mxu0 0.0
    %317 = vmatprep.subr.mxu0 0.0
    %318 = vmatpush1.msra.mxu0 0.0
    %319 = vmatprep.subr.mxu0 0.0
    %320 = vmatpush1.msra.mxu0 0.0
    %321 = vmatprep.subr.mxu0 0.0
    %322 = vmatpush1.msra.mxu0 0.0
    %323 = vmatprep.subr.mxu0 0.0
    %324 = vmatpush1.msra.mxu0 0.0
    %325 = vmatprep.subr.mxu0 0.0
    %326 = vmatpush1.msra.mxu0 0.0
    %327 = vmatprep.subr.mxu0 0.0
    %328 = vmatpush1.msra.mxu0 0.0
    %329 = vmatprep.subr.mxu0 0.0
    %330 = vmatpush1.msra.mxu0 0.0
    %331 = vmatprep.mubr.f32.mxu0 0.0
    %332 = vmatmul.mubr.f32.gmra.mrb[0].mxu0 %v247
    %v333 = vpop.f32.mrb[0].mxu0
    %v334 = vadd.f32 0.0, %v333
    %v335 = vpop.f32.mrb[0].mxu0
    %336 = vmatprep.mubr.f32.mxu0 0.0
    %337 = vmatmul.mubr.f32.gmra.mrb[0].mxu0 %v248
    %v338 = vpop.f32.mrb[0].mxu0
    %v339 = vadd.f32 0.0, %v338
    %v340 = vpop.f32.mrb[0].mxu0
    %341 = vdwg.mxu0
    %v342 = vadd.f32 %v249, %v334
    %v343 = vadd.f32 %v250, %v339
    %344 = vst.msk [vmem:[#allocation2] sm:$0xff] %vm117, %v342
    %345 = vst.msk [vmem:[#allocation2 + $0x8] sm:$0xff] %vm117, %v343
    // Predicated region
    $region46: #{feed_forward.1} parent=1 // pred_check
      %p346 = pneg %p85
    $region47: #{feed_forward.1} parent=1 // pred_check_branch
      %348 = sbr.rel (%p346) target = $region49
    $region48: #{feed_forward.1} parent=1 // pred_region
      %v349 = vld [vmem:[#allocation2] sm:$0xff]
      %v350 = vld [vmem:[#allocation2 + $0x8] sm:$0xff]
      %v351 = vld [vmem:[#allocation11] sm:$0x1]
      %v353 = vlaneseq
      %v354 = vshrl.u32 %v353, 7
      %v355 = vsub.s32 0, %v354
      %v356 = vrot.slane %v351, %v355
      %v358 = vadd.f32 %v349, %v356
      %v359 = vadd.f32 %v350, %v356
      %360 = vst.msk [vmem:[#allocation12] sm:$0xff] %vm117, %v358
      %361 = vst.msk [vmem:[#allocation12 + $0x8] sm:$0xff] %vm117, %v359
    $region49: #{feed_forward.1} parent=1 // pred_fallthru
      _
    // Predicated region
    $region50: #{feed_forward.1} parent=1 // pred_check
      _
    $region51: #{feed_forward.1} parent=1 // pred_check_branch
      %363 = sbr.rel (0) target = $region53
    $region52: #{feed_forward.1} parent=1 // pred_region
      %s365 = ssub.s32 256, 256
      %366 = vsyncadd [#allocation5], %s365
      %s367 = sshll.u32 [#allocation12], 4
      %s368 = int_to_ptr.vmem [resolvable:$true] %s367
      %373 = dma.vmem_to_hbm [thread:$0]  %s368, 256, %s5, [#allocation5], 128, 128, 8
    $region53: #{feed_forward.1} parent=1 // pred_fallthru
      _
    // Predicated region
    $region54: #{feed_forward.1} parent=1 // pred_check
      _
    $region55: #{feed_forward.1} parent=1 // pred_check_branch
      %375 = sbr.rel (0) target = $region57
    $region56: #{feed_forward.1} parent=1 // pred_region
      %376 = dma.done [#allocation5], 256
    $region57: #{feed_forward.1} parent=1 // pred_fallthru
      _
    %377 = vsyncpa [#allocation4], 1
    %378 = vsyncpa [#allocation7], 1
    %379 = vsyncpa [#allocation10], 1
    %380 = vsyncpa [#allocation5], 1

</llo_original>
